<compile_context>
chip_gen: v6e
topology: v6e:2x2x1
jax: 0.10.0
libtpu: 0.0.40
codegen_flags: <defaults>
</compile_context>

<pallas_src>
import jax
import jax.numpy as jnp
import numpy as np
from jax.experimental import pallas as pl
from jax.experimental.pallas import tpu as pltpu


def conv1x1_kernel(x_ref, w_ref, b_ref, o_ref):
    """1x1 conv (channel contraction) over a lane-dense pixel tile.

    x_ref: (Cin, T)  VMEM f32   -- T pixels on the lane axis
    w_ref: (Cout, Cin) SMEM f32 -- scalar reads, broadcast over lanes
    b_ref: (Cout,)     SMEM f32
    o_ref: (Cout, T) VMEM f32   -- o[c, :] = sum_k w[c, k] * x[k, :] + b[c]
    """
    x = x_ref[...]                      # (Cin, T)
    c_out, c_in = w_ref.shape
    for c in range(c_out):              # fully unrolled: Cout*Cin = 32 VPU FMAs
        acc = x[0:1, :] * w_ref[c, 0]
        for k in range(1, c_in):
            acc = acc + x[k:k + 1, :] * w_ref[c, k]
        o_ref[c:c + 1, :] = acc + b_ref[c]


def _hw_tile(hw, cap=32768):
    """Largest pixel-tile <= cap that divides hw (multiple of 128 when possible)."""
    if hw <= cap or hw % 128 != 0:
        return hw                       # full-dim block (small / irregular inputs)
    t = (cap // 128) * 128
    while hw % t != 0:
        t -= 128
    return t


def model_forward(x, weight, bias):
    """x: (N, Cin=8, H, W) float32 NCHW.  Returns (N, Cout=4, H+2, W+2) float32."""
    N, Cin, H, W = x.shape
    Cout = weight.shape[0]
    Hv, Wv = H + 2, W + 2
    HW = H * W

    # ---- glue: cheap reshapes only (no transposes, no mask construction) -----
    w2d = weight[:, :, 0, 0].astype(jnp.float32)      # (Cout, Cin)  -> SMEM
    b1d = bias.astype(jnp.float32)                    # (Cout,)      -> SMEM
    x3d = x.reshape(N, Cin, HW).astype(jnp.float32)   # free reshape of NCHW

    thw = _hw_tile(HW)
    grid = (N, HW // thw)

    # ---- Pallas hot path: lane-dense 1x1 conv + bias --------------------------
    y3d = pl.pallas_call(
        conv1x1_kernel,
        out_shape=jax.ShapeDtypeStruct((N, Cout, HW), jnp.float32),
        grid=grid,
        in_specs=[
            pl.BlockSpec((None, Cin, thw), lambda n, j: (n, 0, j)),
            pl.BlockSpec(memory_space=pltpu.MemorySpace.SMEM),
            pl.BlockSpec(memory_space=pltpu.MemorySpace.SMEM),
        ],
        out_specs=pl.BlockSpec((None, Cout, thw), lambda n, j: (n, 0, j)),
        compiler_params=pltpu.CompilerParams(
            dimension_semantics=("parallel", "parallel")),
    )(x3d, w2d, b1d)

    y_interior = y3d.reshape(N, Cout, H, W)

    # ---- glue: zero-padded 1x1 conv => border pixels equal the bias ----------
    c = jnp.broadcast_to(bias.reshape(1, Cout, 1, 1).astype(jnp.float32),
                         (N, Cout, Hv, Wv))
    c = c.at[:, :, 1:H + 1, 1:W + 1].set(y_interior)
    return c


def reference_forward(x, weight, bias):
    """Plain-JAX reference for correctness checking."""
    v = jax.lax.conv_general_dilated(
        x, weight, window_strides=(1, 1), padding=((1, 1), (1, 1)),
        dimension_numbers=("NCHW", "OIHW", "NCHW"))
    v = v + bias.reshape(1, -1, 1, 1)
    return v  # multiplied by ones (identity)


if __name__ == "__main__":
    key = jax.random.PRNGKey(0)
    kx, kw, kb = jax.random.split(key, 3)

    N, Cin, H, W = 2, 8, 16, 16
    Cout = 4

    x = jax.random.uniform(kx, (N, Cin, H, W), dtype=jnp.float32)

    # Deterministic Conv2d(8, 4, 1) parameter init (uniform(-1/sqrt(fan_in), ...))
    fan_in = Cin * 1 * 1
    bound = 1.0 / np.sqrt(fan_in)
    weight = jax.random.uniform(kw, (Cout, Cin, 1, 1), dtype=jnp.float32,
                                minval=-bound, maxval=bound)
    bias = jax.random.uniform(kb, (Cout,), dtype=jnp.float32,
                              minval=-bound, maxval=bound)

    out = jax.block_until_ready(model_forward(x, weight, bias))
    ref = jax.block_until_ready(reference_forward(x, weight, bias))

    assert out.shape == (N, Cout, H + 2, W + 2)
    assert np.allclose(np.asarray(out), np.asarray(ref), atol=1e-5, rtol=1e-5)

    print("KERNEL_OK")
</pallas_src>

<mosaic_0001>
module attributes {stable_mosaic.version = 11 : i64} {
  func.func @conv1x1_kernel(%arg0: i32, %arg1: i32, %arg2: memref<1x8x256xf32, #tpu.memory_space<vmem>>, %arg3: memref<4x8xf32, #tpu.memory_space<smem>>, %arg4: memref<4xf32, #tpu.memory_space<smem>>, %arg5: memref<1x4x256xf32, #tpu.memory_space<vmem>>) attributes {dimension_semantics = [#tpu.dimension_semantics<parallel>, #tpu.dimension_semantics<parallel>], iteration_bounds = array<i64: 2, 1>, scalar_prefetch = 0 : i64, scratch_operands = 0 : i64, tpu.core_type = #tpu.core_type<tc>, window_params = [{transform_indices = @transform_0, window_bounds = array<i64: 1, 8, 256>}, {transform_indices = @transform_1, window_bounds = array<i64: 4, 8>}, {transform_indices = @transform_2, window_bounds = array<i64: 4>}, {transform_indices = @transform_3, window_bounds = array<i64: 1, 4, 256>}]} {
    %c0 = arith.constant 0 : index
    %c0_0 = arith.constant 0 : index
    %c0_1 = arith.constant 0 : index
    %0 = vector.load %arg2[%c0, %c0_0, %c0_1] : memref<1x8x256xf32, #tpu.memory_space<vmem>>, vector<1x8x256xf32>
    %1 = vector.shape_cast %0 : vector<1x8x256xf32> to vector<8x256xf32>
    %2 = vector.extract_strided_slice %1 {offsets = [0, 0], sizes = [1, 256], strides = [1, 1]} : vector<8x256xf32> to vector<1x256xf32>
    %c0_2 = arith.constant 0 : index
    %c0_3 = arith.constant 0 : index
    %3 = memref.load %arg3[%c0_2, %c0_3] : memref<4x8xf32, #tpu.memory_space<smem>>
    %4 = vector.broadcast %3 : f32 to vector<1x256xf32>
    %5 = arith.mulf %2, %4 : vector<1x256xf32>
    %6 = vector.extract_strided_slice %1 {offsets = [1, 0], sizes = [1, 256], strides = [1, 1]} : vector<8x256xf32> to vector<1x256xf32>
    %c0_4 = arith.constant 0 : index
    %c1 = arith.constant 1 : index
    %7 = memref.load %arg3[%c0_4, %c1] : memref<4x8xf32, #tpu.memory_space<smem>>
    %8 = vector.broadcast %7 : f32 to vector<1x256xf32>
    %9 = arith.mulf %6, %8 : vector<1x256xf32>
    %10 = arith.addf %5, %9 : vector<1x256xf32>
    %11 = vector.extract_strided_slice %1 {offsets = [2, 0], sizes = [1, 256], strides = [1, 1]} : vector<8x256xf32> to vector<1x256xf32>
    %c0_5 = arith.constant 0 : index
    %c2 = arith.constant 2 : index
    %12 = memref.load %arg3[%c0_5, %c2] : memref<4x8xf32, #tpu.memory_space<smem>>
    %13 = vector.broadcast %12 : f32 to vector<1x256xf32>
    %14 = arith.mulf %11, %13 : vector<1x256xf32>
    %15 = arith.addf %10, %14 : vector<1x256xf32>
    %16 = vector.extract_strided_slice %1 {offsets = [3, 0], sizes = [1, 256], strides = [1, 1]} : vector<8x256xf32> to vector<1x256xf32>
    %c0_6 = arith.constant 0 : index
    %c3 = arith.constant 3 : index
    %17 = memref.load %arg3[%c0_6, %c3] : memref<4x8xf32, #tpu.memory_space<smem>>
    %18 = vector.broadcast %17 : f32 to vector<1x256xf32>
    %19 = arith.mulf %16, %18 : vector<1x256xf32>
    %20 = arith.addf %15, %19 : vector<1x256xf32>
    %21 = vector.extract_strided_slice %1 {offsets = [4, 0], sizes = [1, 256], strides = [1, 1]} : vector<8x256xf32> to vector<1x256xf32>
    %c0_7 = arith.constant 0 : index
    %c4 = arith.constant 4 : index
    %22 = memref.load %arg3[%c0_7, %c4] : memref<4x8xf32, #tpu.memory_space<smem>>
    %23 = vector.broadcast %22 : f32 to vector<1x256xf32>
    %24 = arith.mulf %21, %23 : vector<1x256xf32>
    %25 = arith.addf %20, %24 : vector<1x256xf32>
    %26 = vector.extract_strided_slice %1 {offsets = [5, 0], sizes = [1, 256], strides = [1, 1]} : vector<8x256xf32> to vector<1x256xf32>
    %c0_8 = arith.constant 0 : index
    %c5 = arith.constant 5 : index
    %27 = memref.load %arg3[%c0_8, %c5] : memref<4x8xf32, #tpu.memory_space<smem>>
    %28 = vector.broadcast %27 : f32 to vector<1x256xf32>
    %29 = arith.mulf %26, %28 : vector<1x256xf32>
    %30 = arith.addf %25, %29 : vector<1x256xf32>
    %31 = vector.extract_strided_slice %1 {offsets = [6, 0], sizes = [1, 256], strides = [1, 1]} : vector<8x256xf32> to vector<1x256xf32>
    %c0_9 = arith.constant 0 : index
    %c6 = arith.constant 6 : index
    %32 = memref.load %arg3[%c0_9, %c6] : memref<4x8xf32, #tpu.memory_space<smem>>
    %33 = vector.broadcast %32 : f32 to vector<1x256xf32>
    %34 = arith.mulf %31, %33 : vector<1x256xf32>
    %35 = arith.addf %30, %34 : vector<1x256xf32>
    %36 = vector.extract_strided_slice %1 {offsets = [7, 0], sizes = [1, 256], strides = [1, 1]} : vector<8x256xf32> to vector<1x256xf32>
    %c0_10 = arith.constant 0 : index
    %c7 = arith.constant 7 : index
    %37 = memref.load %arg3[%c0_10, %c7] : memref<4x8xf32, #tpu.memory_space<smem>>
    %38 = vector.broadcast %37 : f32 to vector<1x256xf32>
    %39 = arith.mulf %36, %38 : vector<1x256xf32>
    %40 = arith.addf %35, %39 : vector<1x256xf32>
    %c0_11 = arith.constant 0 : index
    %41 = memref.load %arg4[%c0_11] : memref<4xf32, #tpu.memory_space<smem>>
    %42 = vector.broadcast %41 : f32 to vector<1x256xf32>
    %43 = arith.addf %40, %42 : vector<1x256xf32>
    %c0_12 = arith.constant 0 : index
    %c0_13 = arith.constant 0 : index
    %c0_14 = arith.constant 0 : index
    %44 = vector.load %arg5[%c0_12, %c0_13, %c0_14] : memref<1x4x256xf32, #tpu.memory_space<vmem>>, vector<1x1x256xf32>
    %45 = vector.shape_cast %44 : vector<1x1x256xf32> to vector<1x256xf32>
    %46 = vector.shape_cast %43 : vector<1x256xf32> to vector<1x1x256xf32>
    tpu.vector_store %arg5[%c0_12, %c0_13, %c0_14], %46 {strides = array<i32>} : memref<1x4x256xf32, #tpu.memory_space<vmem>>, vector<1x1x256xf32>,
    %47 = vector.extract_strided_slice %1 {offsets = [0, 0], sizes = [1, 256], strides = [1, 1]} : vector<8x256xf32> to vector<1x256xf32>
    %c1_15 = arith.constant 1 : index
    %c0_16 = arith.constant 0 : index
    %48 = memref.load %arg3[%c1_15, %c0_16] : memref<4x8xf32, #tpu.memory_space<smem>>
    %49 = vector.broadcast %48 : f32 to vector<1x256xf32>
    %50 = arith.mulf %47, %49 : vector<1x256xf32>
    %51 = vector.extract_strided_slice %1 {offsets = [1, 0], sizes = [1, 256], strides = [1, 1]} : vector<8x256xf32> to vector<1x256xf32>
    %c1_17 = arith.constant 1 : index
    %c1_18 = arith.constant 1 : index
    %52 = memref.load %arg3[%c1_17, %c1_18] : memref<4x8xf32, #tpu.memory_space<smem>>
    %53 = vector.broadcast %52 : f32 to vector<1x256xf32>
    %54 = arith.mulf %51, %53 : vector<1x256xf32>
    %55 = arith.addf %50, %54 : vector<1x256xf32>
    %56 = vector.extract_strided_slice %1 {offsets = [2, 0], sizes = [1, 256], strides = [1, 1]} : vector<8x256xf32> to vector<1x256xf32>
    %c1_19 = arith.constant 1 : index
    %c2_20 = arith.constant 2 : index
    %57 = memref.load %arg3[%c1_19, %c2_20] : memref<4x8xf32, #tpu.memory_space<smem>>
    %58 = vector.broadcast %57 : f32 to vector<1x256xf32>
    %59 = arith.mulf %56, %58 : vector<1x256xf32>
    %60 = arith.addf %55, %59 : vector<1x256xf32>
    %61 = vector.extract_strided_slice %1 {offsets = [3, 0], sizes = [1, 256], strides = [1, 1]} : vector<8x256xf32> to vector<1x256xf32>
    %c1_21 = arith.constant 1 : index
    %c3_22 = arith.constant 3 : index
    %62 = memref.load %arg3[%c1_21, %c3_22] : memref<4x8xf32, #tpu.memory_space<smem>>
    %63 = vector.broadcast %62 : f32 to vector<1x256xf32>
    %64 = arith.mulf %61, %63 : vector<1x256xf32>
    %65 = arith.addf %60, %64 : vector<1x256xf32>
    %66 = vector.extract_strided_slice %1 {offsets = [4, 0], sizes = [1, 256], strides = [1, 1]} : vector<8x256xf32> to vector<1x256xf32>
    %c1_23 = arith.constant 1 : index
    %c4_24 = arith.constant 4 : index
    %67 = memref.load %arg3[%c1_23, %c4_24] : memref<4x8xf32, #tpu.memory_space<smem>>
    %68 = vector.broadcast %67 : f32 to vector<1x256xf32>
    %69 = arith.mulf %66, %68 : vector<1x256xf32>
    %70 = arith.addf %65, %69 : vector<1x256xf32>
    %71 = vector.extract_strided_slice %1 {offsets = [5, 0], sizes = [1, 256], strides = [1, 1]} : vector<8x256xf32> to vector<1x256xf32>
    %c1_25 = arith.constant 1 : index
    %c5_26 = arith.constant 5 : index
    %72 = memref.load %arg3[%c1_25, %c5_26] : memref<4x8xf32, #tpu.memory_space<smem>>
    %73 = vector.broadcast %72 : f32 to vector<1x256xf32>
    %74 = arith.mulf %71, %73 : vector<1x256xf32>
    %75 = arith.addf %70, %74 : vector<1x256xf32>
    %76 = vector.extract_strided_slice %1 {offsets = [6, 0], sizes = [1, 256], strides = [1, 1]} : vector<8x256xf32> to vector<1x256xf32>
    %c1_27 = arith.constant 1 : index
    %c6_28 = arith.constant 6 : index
    %77 = memref.load %arg3[%c1_27, %c6_28] : memref<4x8xf32, #tpu.memory_space<smem>>
    %78 = vector.broadcast %77 : f32 to vector<1x256xf32>
    %79 = arith.mulf %76, %78 : vector<1x256xf32>
    %80 = arith.addf %75, %79 : vector<1x256xf32>
    %81 = vector.extract_strided_slice %1 {offsets = [7, 0], sizes = [1, 256], strides = [1, 1]} : vector<8x256xf32> to vector<1x256xf32>
    %c1_29 = arith.constant 1 : index
    %c7_30 = arith.constant 7 : index
    %82 = memref.load %arg3[%c1_29, %c7_30] : memref<4x8xf32, #tpu.memory_space<smem>>
    %83 = vector.broadcast %82 : f32 to vector<1x256xf32>
    %84 = arith.mulf %81, %83 : vector<1x256xf32>
    %85 = arith.addf %80, %84 : vector<1x256xf32>
    %c1_31 = arith.constant 1 : index
    %86 = memref.load %arg4[%c1_31] : memref<4xf32, #tpu.memory_space<smem>>
    %87 = vector.broadcast %86 : f32 to vector<1x256xf32>
    %88 = arith.addf %85, %87 : vector<1x256xf32>
    %c0_32 = arith.constant 0 : index
    %c1_33 = arith.constant 1 : index
    %c0_34 = arith.constant 0 : index
    %89 = vector.load %arg5[%c0_32, %c1_33, %c0_34] : memref<1x4x256xf32, #tpu.memory_space<vmem>>, vector<1x1x256xf32>
    %90 = vector.shape_cast %89 : vector<1x1x256xf32> to vector<1x256xf32>
    %91 = vector.shape_cast %88 : vector<1x256xf32> to vector<1x1x256xf32>
    tpu.vector_store %arg5[%c0_32, %c1_33, %c0_34], %91 {strides = array<i32>} : memref<1x4x256xf32, #tpu.memory_space<vmem>>, vector<1x1x256xf32>,
    %92 = vector.extract_strided_slice %1 {offsets = [0, 0], sizes = [1, 256], strides = [1, 1]} : vector<8x256xf32> to vector<1x256xf32>
    %c2_35 = arith.constant 2 : index
    %c0_36 = arith.constant 0 : index
    %93 = memref.load %arg3[%c2_35, %c0_36] : memref<4x8xf32, #tpu.memory_space<smem>>
    %94 = vector.broadcast %93 : f32 to vector<1x256xf32>
    %95 = arith.mulf %92, %94 : vector<1x256xf32>
    %96 = vector.extract_strided_slice %1 {offsets = [1, 0], sizes = [1, 256], strides = [1, 1]} : vector<8x256xf32> to vector<1x256xf32>
    %c2_37 = arith.constant 2 : index
    %c1_38 = arith.constant 1 : index
    %97 = memref.load %arg3[%c2_37, %c1_38] : memref<4x8xf32, #tpu.memory_space<smem>>
    %98 = vector.broadcast %97 : f32 to vector<1x256xf32>
    %99 = arith.mulf %96, %98 : vector<1x256xf32>
    %100 = arith.addf %95, %99 : vector<1x256xf32>
    %101 = vector.extract_strided_slice %1 {offsets = [2, 0], sizes = [1, 256], strides = [1, 1]} : vector<8x256xf32> to vector<1x256xf32>
    %c2_39 = arith.constant 2 : index
    %c2_40 = arith.constant 2 : index
    %102 = memref.load %arg3[%c2_39, %c2_40] : memref<4x8xf32, #tpu.memory_space<smem>>
    %103 = vector.broadcast %102 : f32 to vector<1x256xf32>
    %104 = arith.mulf %101, %103 : vector<1x256xf32>
    %105 = arith.addf %100, %104 : vector<1x256xf32>
    %106 = vector.extract_strided_slice %1 {offsets = [3, 0], sizes = [1, 256], strides = [1, 1]} : vector<8x256xf32> to vector<1x256xf32>
    %c2_41 = arith.constant 2 : index
    %c3_42 = arith.constant 3 : index
    %107 = memref.load %arg3[%c2_41, %c3_42] : memref<4x8xf32, #tpu.memory_space<smem>>
    %108 = vector.broadcast %107 : f32 to vector<1x256xf32>
    %109 = arith.mulf %106, %108 : vector<1x256xf32>
    %110 = arith.addf %105, %109 : vector<1x256xf32>
    %111 = vector.extract_strided_slice %1 {offsets = [4, 0], sizes = [1, 256], strides = [1, 1]} : vector<8x256xf32> to vector<1x256xf32>
    %c2_43 = arith.constant 2 : index
    %c4_44 = arith.constant 4 : index
    %112 = memref.load %arg3[%c2_43, %c4_44] : memref<4x8xf32, #tpu.memory_space<smem>>
    %113 = vector.broadcast %112 : f32 to vector<1x256xf32>
    %114 = arith.mulf %111, %113 : vector<1x256xf32>
    %115 = arith.addf %110, %114 : vector<1x256xf32>
    %116 = vector.extract_strided_slice %1 {offsets = [5, 0], sizes = [1, 256], strides = [1, 1]} : vector<8x256xf32> to vector<1x256xf32>
    %c2_45 = arith.constant 2 : index
    %c5_46 = arith.constant 5 : index
    %117 = memref.load %arg3[%c2_45, %c5_46] : memref<4x8xf32, #tpu.memory_space<smem>>
    %118 = vector.broadcast %117 : f32 to vector<1x256xf32>
    %119 = arith.mulf %116, %118 : vector<1x256xf32>
    %120 = arith.addf %115, %119 : vector<1x256xf32>
    %121 = vector.extract_strided_slice %1 {offsets = [6, 0], sizes = [1, 256], strides = [1, 1]} : vector<8x256xf32> to vector<1x256xf32>
    %c2_47 = arith.constant 2 : index
    %c6_48 = arith.constant 6 : index
    %122 = memref.load %arg3[%c2_47, %c6_48] : memref<4x8xf32, #tpu.memory_space<smem>>
    %123 = vector.broadcast %122 : f32 to vector<1x256xf32>
    %124 = arith.mulf %121, %123 : vector<1x256xf32>
    %125 = arith.addf %120, %124 : vector<1x256xf32>
    %126 = vector.extract_strided_slice %1 {offsets = [7, 0], sizes = [1, 256], strides = [1, 1]} : vector<8x256xf32> to vector<1x256xf32>
    %c2_49 = arith.constant 2 : index
    %c7_50 = arith.constant 7 : index
    %127 = memref.load %arg3[%c2_49, %c7_50] : memref<4x8xf32, #tpu.memory_space<smem>>
    %128 = vector.broadcast %127 : f32 to vector<1x256xf32>
    %129 = arith.mulf %126, %128 : vector<1x256xf32>
    %130 = arith.addf %125, %129 : vector<1x256xf32>
    %c2_51 = arith.constant 2 : index
    %131 = memref.load %arg4[%c2_51] : memref<4xf32, #tpu.memory_space<smem>>
    %132 = vector.broadcast %131 : f32 to vector<1x256xf32>
    %133 = arith.addf %130, %132 : vector<1x256xf32>
    %c0_52 = arith.constant 0 : index
    %c2_53 = arith.constant 2 : index
    %c0_54 = arith.constant 0 : index
    %134 = vector.load %arg5[%c0_52, %c2_53, %c0_54] : memref<1x4x256xf32, #tpu.memory_space<vmem>>, vector<1x1x256xf32>
    %135 = vector.shape_cast %134 : vector<1x1x256xf32> to vector<1x256xf32>
    %136 = vector.shape_cast %133 : vector<1x256xf32> to vector<1x1x256xf32>
    tpu.vector_store %arg5[%c0_52, %c2_53, %c0_54], %136 {strides = array<i32>} : memref<1x4x256xf32, #tpu.memory_space<vmem>>, vector<1x1x256xf32>,
    %137 = vector.extract_strided_slice %1 {offsets = [0, 0], sizes = [1, 256], strides = [1, 1]} : vector<8x256xf32> to vector<1x256xf32>
    %c3_55 = arith.constant 3 : index
    %c0_56 = arith.constant 0 : index
    %138 = memref.load %arg3[%c3_55, %c0_56] : memref<4x8xf32, #tpu.memory_space<smem>>
    %139 = vector.broadcast %138 : f32 to vector<1x256xf32>
    %140 = arith.mulf %137, %139 : vector<1x256xf32>
    %141 = vector.extract_strided_slice %1 {offsets = [1, 0], sizes = [1, 256], strides = [1, 1]} : vector<8x256xf32> to vector<1x256xf32>
    %c3_57 = arith.constant 3 : index
    %c1_58 = arith.constant 1 : index
    %142 = memref.load %arg3[%c3_57, %c1_58] : memref<4x8xf32, #tpu.memory_space<smem>>
    %143 = vector.broadcast %142 : f32 to vector<1x256xf32>
    %144 = arith.mulf %141, %143 : vector<1x256xf32>
    %145 = arith.addf %140, %144 : vector<1x256xf32>
    %146 = vector.extract_strided_slice %1 {offsets = [2, 0], sizes = [1, 256], strides = [1, 1]} : vector<8x256xf32> to vector<1x256xf32>
    %c3_59 = arith.constant 3 : index
    %c2_60 = arith.constant 2 : index
    %147 = memref.load %arg3[%c3_59, %c2_60] : memref<4x8xf32, #tpu.memory_space<smem>>
    %148 = vector.broadcast %147 : f32 to vector<1x256xf32>
    %149 = arith.mulf %146, %148 : vector<1x256xf32>
    %150 = arith.addf %145, %149 : vector<1x256xf32>
    %151 = vector.extract_strided_slice %1 {offsets = [3, 0], sizes = [1, 256], strides = [1, 1]} : vector<8x256xf32> to vector<1x256xf32>
    %c3_61 = arith.constant 3 : index
    %c3_62 = arith.constant 3 : index
    %152 = memref.load %arg3[%c3_61, %c3_62] : memref<4x8xf32, #tpu.memory_space<smem>>
    %153 = vector.broadcast %152 : f32 to vector<1x256xf32>
    %154 = arith.mulf %151, %153 : vector<1x256xf32>
    %155 = arith.addf %150, %154 : vector<1x256xf32>
    %156 = vector.extract_strided_slice %1 {offsets = [4, 0], sizes = [1, 256], strides = [1, 1]} : vector<8x256xf32> to vector<1x256xf32>
    %c3_63 = arith.constant 3 : index
    %c4_64 = arith.constant 4 : index
    %157 = memref.load %arg3[%c3_63, %c4_64] : memref<4x8xf32, #tpu.memory_space<smem>>
    %158 = vector.broadcast %157 : f32 to vector<1x256xf32>
    %159 = arith.mulf %156, %158 : vector<1x256xf32>
    %160 = arith.addf %155, %159 : vector<1x256xf32>
    %161 = vector.extract_strided_slice %1 {offsets = [5, 0], sizes = [1, 256], strides = [1, 1]} : vector<8x256xf32> to vector<1x256xf32>
    %c3_65 = arith.constant 3 : index
    %c5_66 = arith.constant 5 : index
    %162 = memref.load %arg3[%c3_65, %c5_66] : memref<4x8xf32, #tpu.memory_space<smem>>
    %163 = vector.broadcast %162 : f32 to vector<1x256xf32>
    %164 = arith.mulf %161, %163 : vector<1x256xf32>
    %165 = arith.addf %160, %164 : vector<1x256xf32>
    %166 = vector.extract_strided_slice %1 {offsets = [6, 0], sizes = [1, 256], strides = [1, 1]} : vector<8x256xf32> to vector<1x256xf32>
    %c3_67 = arith.constant 3 : index
    %c6_68 = arith.constant 6 : index
    %167 = memref.load %arg3[%c3_67, %c6_68] : memref<4x8xf32, #tpu.memory_space<smem>>
    %168 = vector.broadcast %167 : f32 to vector<1x256xf32>
    %169 = arith.mulf %166, %168 : vector<1x256xf32>
    %170 = arith.addf %165, %169 : vector<1x256xf32>
    %171 = vector.extract_strided_slice %1 {offsets = [7, 0], sizes = [1, 256], strides = [1, 1]} : vector<8x256xf32> to vector<1x256xf32>
    %c3_69 = arith.constant 3 : index
    %c7_70 = arith.constant 7 : index
    %172 = memref.load %arg3[%c3_69, %c7_70] : memref<4x8xf32, #tpu.memory_space<smem>>
    %173 = vector.broadcast %172 : f32 to vector<1x256xf32>
    %174 = arith.mulf %171, %173 : vector<1x256xf32>
    %175 = arith.addf %170, %174 : vector<1x256xf32>
    %c3_71 = arith.constant 3 : index
    %176 = memref.load %arg4[%c3_71] : memref<4xf32, #tpu.memory_space<smem>>
    %177 = vector.broadcast %176 : f32 to vector<1x256xf32>
    %178 = arith.addf %175, %177 : vector<1x256xf32>
    %c0_72 = arith.constant 0 : index
    %c3_73 = arith.constant 3 : index
    %c0_74 = arith.constant 0 : index
    %179 = vector.load %arg5[%c0_72, %c3_73, %c0_74] : memref<1x4x256xf32, #tpu.memory_space<vmem>>, vector<1x1x256xf32>
    %180 = vector.shape_cast %179 : vector<1x1x256xf32> to vector<1x256xf32>
    %181 = vector.shape_cast %178 : vector<1x256xf32> to vector<1x1x256xf32>
    tpu.vector_store %arg5[%c0_72, %c3_73, %c0_74], %181 {strides = array<i32>} : memref<1x4x256xf32, #tpu.memory_space<vmem>>, vector<1x1x256xf32>,
    return
  }
  func.func @transform_0(%arg0: i32, %arg1: i32) -> (i32, i32, i32) {
    %c0_i32 = arith.constant 0 : i32
    %c0_i32_0 = arith.constant 0 : i32
    return %arg0, %c0_i32, %arg1 : i32, i32, i32
  }
  func.func @transform_1(%arg0: i32, %arg1: i32) -> (i32, i32) {
    %c0_i32 = arith.constant 0 : i32
    %c0_i32_0 = arith.constant 0 : i32
    %c0_i32_1 = arith.constant 0 : i32
    return %c0_i32, %c0_i32_0 : i32, i32
  }
  func.func @transform_2(%arg0: i32, %arg1: i32) -> i32 {
    %c0_i32 = arith.constant 0 : i32
    %c0_i32_0 = arith.constant 0 : i32
    return %c0_i32 : i32
  }
  func.func @transform_3(%arg0: i32, %arg1: i32) -> (i32, i32, i32) {
    %c0_i32 = arith.constant 0 : i32
    %c0_i32_0 = arith.constant 0 : i32
    return %arg0, %c0_i32, %arg1 : i32, i32, i32
  }
}

</mosaic_0001>

<llo_original>
// kernel: tpu_custom_call.1
$region0: #{tpu_custom_call.1}
  #allocation0 [shape = 'u32[]', space=smem, size = 0x4, offset = 0x4, fixed_abs, tag = 'smem constant byte address 0x4 - core index']
  #allocation1 [shape = 'u32[144,128]{1,0:T(1,128)}', space=vmem, size = 0x12000, scoped, tag = 'internal scratch']
  %s0 = inlined_call_operand.hbm [shape: f32[2,8,256], index: 0, kind: input, shape index: {}]
  %s1 = inlined_call_operand.hbm [shape: f32[4,8], index: 1, kind: input, shape index: {}]
  %s2 = inlined_call_operand.vmem [shape: f32[4], index: 2, kind: input, shape index: {}]
  %s3 = inlined_call_operand.hbm [shape: f32[2,4,256], index: 3, kind: output, shape index: {}]
  %s4 = sld [smem:[#allocation0]]
  $region57: #{tpu_custom_call.1} parent=0
    _
  %s6 = ssub.s32 1, %s4
  %s7 = scalar_select 0, %s6, %s4
  $region1: #{tpu_custom_call.1} parent=0
    #allocation2 [shape = 'u8[16384]{0}', space=vmem, size = 0x4000, scoped, tag = 'input window, operand 0']
    #allocation3 [shape = 's32[2]{0}', space=sflag, size = 0x8, scoped, tag = 'scoped memory for tpu_custom_call.1']
    #allocation4 [shape = 's32[2]{0}', space=sflag, size = 0x8, scoped, tag = 'scoped memory for tpu_custom_call.1']
    #allocation5 [shape = 's32[2]{0}', space=sflag, size = 0x8, scoped, tag = 'scoped memory for tpu_custom_call.1']
    #allocation6 [shape = 's32[2]{0}', space=sflag, size = 0x8, scoped, tag = 'scoped memory for tpu_custom_call.1']
    #allocation7 [shape = 'u8[2048]{0}', space=smem, size = 0x800, scoped, tag = 'input window, operand 1, single buffered']
    #allocation8 [shape = 'u8[512]{0}', space=smem, size = 0x200, scoped, tag = 'input window, operand 2, single buffered']
    #allocation9 [shape = 'u8[8192]{0}', space=vmem, size = 0x2000, scoped, tag = 'output window, operand 0']
    %8 = vsyncpa [#allocation3], 0
    %s9 = scalar_lea.sflag [#allocation3], 1
    %10 = vsyncpa %s9, 0
    %11 = vsyncpa [#allocation5], 0
    %12 = vsyncpa [#allocation6], 0
    %13 = vsyncpa [#allocation4], 0
    %s14 = scalar_lea.sflag [#allocation4], 1
    %15 = vsyncpa %s14, 0
    loop: start=0, step=1, limit=4
    $region2: #{tpu_custom_call.1} parent=1 // loop_pre_header
      _
    $region3: #{tpu_custom_call.1} parent=1 // loop_header
      %s17 = sphi 0, %s21
      %p18 = scmp.ge.s32.totalorder %s17, 4
      %s24 = sphi 0, %s36
      %s25 = sphi 0, %s32
      %s26 = sphi 0, %s24
      %s27 = sphi 0, %s25
      %s28 = sphi 0, %s26
      %s29 = sphi 0, %s27
      %s41 = sphi 0, %s43
      %s44 = sphi 0, %s41
      %s45 = sphi 0, %s44
      %s61 = sphi 0, %s45
      %s65 = sphi 0, %s65
      %s67 = sphi 0, %s65
      %s68 = sphi 0, %s67
      %s82 = sphi 0, %s68
      %s86 = sphi 0, %s86
      %s88 = sphi 0, %s86
      %s89 = sphi 0, %s88
      %s103 = sphi 0, %s89
      %s111 = sphi 0, %s113
      %s114 = sphi 0, %s111
      %s115 = sphi 0, %s114
      %s131 = sphi 0, %s115
    $region4: #{tpu_custom_call.1} parent=1 // loop_header_branch
      %20 = sbr.rel (%p18) target = $region8
    $region5: #{tpu_custom_call.1} parent=1 // loop_body
      %s22 = ssub.s32 %s17, 1
      %s23 = ssub.s32 %s17, 2
      %s30 = sadd.s32 1, %s25
      %p31 = scmp.ge.s32.totalorder %s30, 1
      %s32 = scalar_select %p31, 0, %s30
      %s33 = sadd.s32 1, %s24
      %s34 = scalar_select %p31, %s33, %s24
      %p35 = scmp.ge.s32.totalorder %s34, 2
      %s36 = scalar_select %p35, 0, %s34
      %s37 = ssub.s32 %s24, %s36
      %s38 = ssub.s32 %s25, %s32
      %s39 = sor.u32 %s37, %s38
      %p40 = scmp.eq.s32.totalorder %s39, 0
      %s42 = sadd.s32 %s41, 1
      %s43 = scalar_select %p40, %s41, %s42
      %p46 = pneg %p40
      %p47 = scmp.eq.s32.totalorder %s17, 1
      %p48 = por %p46, %p47
      %p49 = scmp.ne.s32.totalorder %s41, %s44
      %p50 = scmp.eq.s32.totalorder %s17, 0
      %p51 = por %p49, %p50
      %p52 = scmp.ne.s32.totalorder %s41, %s44
      %p53 = scmp.eq.s32.totalorder %s22, 1
      %p54 = por %p52, %p53
      %p55 = scmp.ne.s32.totalorder %s44, %s45
      %p56 = scmp.eq.s32.totalorder %s22, 0
      %p57 = por %p55, %p56
      %p58 = scmp.ne.s32.totalorder %s44, %s45
      %p59 = scmp.eq.s32.totalorder %s23, 1
      %p60 = por %p58, %p59
      %p62 = scmp.ne.s32.totalorder %s45, %s61
      %p63 = scmp.eq.s32.totalorder %s23, 0
      %p64 = por %p62, %p63
      %s66 = sadd.s32 %s65, 1
      %p69 = scmp.eq.s32.totalorder %s17, 1
      %p70 = scmp.ne.s32.totalorder %s65, %s67
      %p71 = scmp.eq.s32.totalorder %s17, 0
      %p72 = por %p70, %p71
      %p73 = scmp.ne.s32.totalorder %s65, %s67
      %p74 = scmp.eq.s32.totalorder %s22, 1
      %p75 = por %p73, %p74
      %p76 = scmp.ne.s32.totalorder %s67, %s68
      %p77 = scmp.eq.s32.totalorder %s22, 0
      %p78 = por %p76, %p77
      %p79 = scmp.ne.s32.totalorder %s67, %s68
      %p80 = scmp.eq.s32.totalorder %s23, 1
      %p81 = por %p79, %p80
      %p83 = scmp.ne.s32.totalorder %s68, %s82
      %p84 = scmp.eq.s32.totalorder %s23, 0
      %p85 = por %p83, %p84
      %s87 = sadd.s32 %s86, 1
      %p90 = scmp.eq.s32.totalorder %s17, 1
      %p91 = scmp.ne.s32.totalorder %s86, %s88
      %p92 = scmp.eq.s32.totalorder %s17, 0
      %p93 = por %p91, %p92
      %p94 = scmp.ne.s32.totalorder %s86, %s88
      %p95 = scmp.eq.s32.totalorder %s22, 1
      %p96 = por %p94, %p95
      %p97 = scmp.ne.s32.totalorder %s88, %s89
      %p98 = scmp.eq.s32.totalorder %s22, 0
      %p99 = por %p97, %p98
      %p100 = scmp.ne.s32.totalorder %s88, %s89
      %p101 = scmp.eq.s32.totalorder %s23, 1
      %p102 = por %p100, %p101
      %p104 = scmp.ne.s32.totalorder %s89, %s103
      %p105 = scmp.eq.s32.totalorder %s23, 0
      %p106 = por %p104, %p105
      %s107 = ssub.s32 %s24, %s36
      %s108 = ssub.s32 %s25, %s32
      %s109 = sor.u32 %s107, %s108
      %p110 = scmp.eq.s32.totalorder %s109, 0
      %s112 = sadd.s32 %s111, 1
      %s113 = scalar_select %p110, %s111, %s112
      %p116 = pneg %p110
      %p117 = scmp.eq.s32.totalorder %s17, 1
      %p118 = por %p116, %p117
      %p119 = scmp.ne.s32.totalorder %s111, %s114
      %p120 = scmp.eq.s32.totalorder %s17, 0
      %p121 = por %p119, %p120
      %p122 = scmp.ne.s32.totalorder %s111, %s114
      %p123 = scmp.eq.s32.totalorder %s22, 1
      %p124 = por %p122, %p123
      %p125 = scmp.ne.s32.totalorder %s114, %s115
      %p126 = scmp.eq.s32.totalorder %s22, 0
      %p127 = por %p125, %p126
      %p128 = scmp.ne.s32.totalorder %s114, %s115
      %p129 = scmp.eq.s32.totalorder %s23, 1
      %p130 = por %p128, %p129
      %p132 = scmp.ne.s32.totalorder %s115, %s131
      %p133 = scmp.eq.s32.totalorder %s23, 0
      %p134 = por %p132, %p133
      %p135 = scmp.le.s32.totalorder 1, %s17
      %p136 = scmp.lt.s32.totalorder %s17, 3
      %p137 = pnand %p135, %p136
      %p138 = pneg %p137
      // Predicated region
      $region9: #{tpu_custom_call.1} parent=5 // pred_check
        _
      $region10: #{tpu_custom_call.1} parent=5 // pred_check_branch
        %140 = sbr.rel (%p137) target = $region12
      $region11: #{tpu_custom_call.1} parent=5 // pred_region
        %s141 = ssub.s32 %s17, 1
        // Predicated region
        $region13: #{tpu_custom_call.1} parent=11 // pred_check
          %p142 = pneg %p78
        $region14: #{tpu_custom_call.1} parent=11 // pred_check_branch
          %144 = sbr.rel (%p142) target = $region16
        $region15: #{tpu_custom_call.1} parent=11 // pred_region
          %s146 = ssub.s32 64, 64
          %147 = vsyncadd [#allocation5], %s146
          %150 = dma.hbm_to_smem %s1, 64, [#allocation7], [#allocation5]
        $region16: #{tpu_custom_call.1} parent=11 // pred_fallthru
          _
        // Predicated region
        $region17: #{tpu_custom_call.1} parent=11 // pred_check
          %p151 = pneg %p99
        $region18: #{tpu_custom_call.1} parent=11 // pred_check_branch
          %153 = sbr.rel (%p151) target = $region20
        $region19: #{tpu_custom_call.1} parent=11 // pred_region
          %s155 = ssub.s32 16, 16
          %156 = vsyncadd [#allocation6], %s155
          %s158 = sshll.u32 %s2, 4
          %s159 = int_to_ptr.vmem [resolvable:$true] %s158
          %161 = dma.vmem_to_smem %s159, 16, [#allocation8], [#allocation6]
        $region20: #{tpu_custom_call.1} parent=11 // pred_fallthru
          _
      $region12: #{tpu_custom_call.1} parent=5 // pred_fallthru
        _
      %p162 = scmp.lt.s32.totalorder %s17, 2
      // Predicated region
      $region21: #{tpu_custom_call.1} parent=5 // pred_check
        %p163 = pneg %p162
      $region22: #{tpu_custom_call.1} parent=5 // pred_check_branch
        %165 = sbr.rel (%p163) target = $region24
      $region23: #{tpu_custom_call.1} parent=5 // pred_region
        // Predicated region
        $region25: #{tpu_custom_call.1} parent=23 // pred_check
          %p166 = pneg %p51
        $region26: #{tpu_custom_call.1} parent=23 // pred_check_branch
          %168 = sbr.rel (%p166) target = $region28
        $region27: #{tpu_custom_call.1} parent=23 // pred_region
          %s169 = sand.u32 %s41, 1
          %s170 = scalar_lea.sflag [#allocation3], %s169
          %s171 = sand.u32 %s41, 1
          %s172 = smul.addr %s171, 16
          %s173 = scalar_lea.vmem [#allocation2], %s172
          %s174 = smul.u32 2, %s25
          %s176 = ssub.s32 256, 256
          %177 = vsyncadd %s170, %s176
          %s178 = smul.addr %s24, 2
          %s179 = sadd.s32 %s174, %s178
          %s180 = smul.addr %s179, 128
          %s181 = scalar_lea.hbm %s0, %s180
          %s183 = sshll.u32 %s173, 4
          %s184 = int_to_ptr.vmem [resolvable:$true] %s183
          %186 = dma.hbm_to_vmem [thread:$0]  %s181, 256, %s184, %s170
        $region28: #{tpu_custom_call.1} parent=23 // pred_fallthru
          _
      $region24: #{tpu_custom_call.1} parent=5 // pred_fallthru
        _
      %p187 = scmp.le.s32.totalorder 1, %s17
      %p188 = scmp.lt.s32.totalorder %s17, 3
      %p189 = pnand %p187, %p188
      %p190 = pneg %p189
      // Predicated region
      $region29: #{tpu_custom_call.1} parent=5 // pred_check
        _
      $region30: #{tpu_custom_call.1} parent=5 // pred_check_branch
        %192 = sbr.rel (%p189) target = $region32
      $region31: #{tpu_custom_call.1} parent=5 // pred_region
        %s193 = ssub.s32 %s17, 1
        %s194 = sand.u32 %s44, 1
        %s195 = scalar_lea.sflag [#allocation3], %s194
        %s196 = sand.u32 %s44, 1
        %s197 = smul.addr %s196, 16
        %s198 = scalar_lea.vmem [#allocation2], %s197
        // Predicated region
        $region33: #{tpu_custom_call.1} parent=31 // pred_check
          %p199 = pneg %p57
        $region34: #{tpu_custom_call.1} parent=31 // pred_check_branch
          %201 = sbr.rel (%p199) target = $region36
        $region35: #{tpu_custom_call.1} parent=31 // pred_region
          %202 = dma.done %s195, 256
        $region36: #{tpu_custom_call.1} parent=31 // pred_fallthru
          _
        // Predicated region
        $region37: #{tpu_custom_call.1} parent=31 // pred_check
          %p203 = pneg %p78
        $region38: #{tpu_custom_call.1} parent=31 // pred_check_branch
          %205 = sbr.rel (%p203) target = $region40
        $region39: #{tpu_custom_call.1} parent=31 // pred_region
          %206 = dma.done [#allocation5], 64
        $region40: #{tpu_custom_call.1} parent=31 // pred_fallthru
          _
        // Predicated region
        $region41: #{tpu_custom_call.1} parent=31 // pred_check
          %p207 = pneg %p99
        $region42: #{tpu_custom_call.1} parent=31 // pred_check_branch
          %209 = sbr.rel (%p207) target = $region44
        $region43: #{tpu_custom_call.1} parent=31 // pred_region
          %210 = dma.done [#allocation6], 16
        $region44: #{tpu_custom_call.1} parent=31 // pred_fallthru
          _
        %211 = sfence
        %s212 = sand.u32 %s44, 1
        %s213 = scalar_lea.sflag [#allocation3], %s212
        %s214 = sand.u32 %s44, 1
        %s215 = smul.addr %s214, 16
        %s216 = scalar_lea.vmem [#allocation2], %s215
        %p217 = pneg %p57
        %p218 = pneg %p54
        %p219 = pneg %p78
        %p220 = pneg %p75
        %p221 = pneg %p99
        %p222 = pneg %p96
        %p223 = pneg %p127
        %p224 = pneg %p124
        %s225 = sand.u32 %s114, 1
        %s226 = scalar_lea.sflag [#allocation4], %s225
        %s227 = sand.u32 %s114, 1
        %s228 = smul.addr %s227, 8
        %s229 = scalar_lea.vmem [#allocation9], %s228
        %s230 = smul.u32 2, %s27
        %s231 = smul.u32 2, %s27
        %v232 = vld [vmem:[%s198] sm:$0xff]
        %v233 = vld [vmem:[%s198 + $0x8] sm:$0xff]
        %s234 = sld [smem:[#allocation7]]
        %v235 = vstv %s234
        %v236 = vmul.f32 %v232, %v235
        %v237 = vmul.f32 %v233, %v235
        %s238 = sld [smem:[#allocation7 + $0x1]]
        %v239 = vstv %s238
        %v240 = vmul.f32 %v232, %v239
        %v241 = vmul.f32 %v233, %v239
        %v244 = vrot.slane %v240, 1
        %v245 = vrot.slane %v241, 1
        %v248 = vadd.f32 %v236, %v244
        %v249 = vadd.f32 %v237, %v245
        %s250 = sld [smem:[#allocation7 + $0x2]]
        %v251 = vstv %s250
        %v252 = vmul.f32 %v232, %v251
        %v253 = vmul.f32 %v233, %v251
        %v256 = vrot.slane %v252, 2
        %v257 = vrot.slane %v253, 2
        %v260 = vadd.f32 %v248, %v256
        %v261 = vadd.f32 %v249, %v257
        %s262 = sld [smem:[#allocation7 + $0x3]]
        %v263 = vstv %s262
        %v264 = vmul.f32 %v232, %v263
        %v265 = vmul.f32 %v233, %v263
        %v268 = vrot.slane %v264, 3
        %v269 = vrot.slane %v265, 3
        %v272 = vadd.f32 %v260, %v268
        %v273 = vadd.f32 %v261, %v269
        %s274 = sld [smem:[#allocation7 + $0x4]]
        %v275 = vstv %s274
        %v276 = vmul.f32 %v232, %v275
        %v277 = vmul.f32 %v233, %v275
        %v280 = vrot.slane %v276, 4
        %v281 = vrot.slane %v277, 4
        %v284 = vadd.f32 %v272, %v280
        %v285 = vadd.f32 %v273, %v281
        %s286 = sld [smem:[#allocation7 + $0x5]]
        %v287 = vstv %s286
        %v288 = vmul.f32 %v232, %v287
        %v289 = vmul.f32 %v233, %v287
        %v292 = vrot.slane %v288, 5
        %v293 = vrot.slane %v289, 5
        %v296 = vadd.f32 %v284, %v292
        %v297 = vadd.f32 %v285, %v293
        %s298 = sld [smem:[#allocation7 + $0x6]]
        %v299 = vstv %s298
        %v300 = vmul.f32 %v232, %v299
        %v301 = vmul.f32 %v233, %v299
        %v304 = vrot.slane %v300, 6
        %v305 = vrot.slane %v301, 6
        %v308 = vadd.f32 %v296, %v304
        %v309 = vadd.f32 %v297, %v305
        %s310 = sld [smem:[#allocation7 + $0x7]]
        %v311 = vstv %s310
        %v312 = vmul.f32 %v232, %v311
        %v313 = vmul.f32 %v233, %v311
        %v316 = vrot.slane %v312, 7
        %v317 = vrot.slane %v313, 7
        %v320 = vadd.f32 %v308, %v316
        %v321 = vadd.f32 %v309, %v317
        %s322 = sld [smem:[#allocation8]]
        %v323 = vstv %s322
        %v324 = vadd.f32 %v320, %v323
        %v325 = vadd.f32 %v321, %v323
        %v328 = vcombine.low %v324, %v325
        %v330 = vunpack.c.l.s4 1966171168
        %v331 = vunpack.c.0.s8 %v330
        %v332 = vlaneseq
        %v333 = vshrl.u32 %v332, 7
        %v334 = vsub.s32 %v331, %v333
        %v335 = vrot.slane %v328, %v334
        %v337 = vunpack.c.l.s4 1966171168
        %v338 = vunpack.c.0.s8 %v337
        %v339 = vlaneseq
        %v340 = vshrl.u32 %v339, 7
        %v341 = vsub.s32 %v338, %v340
        %v342 = vrot.slane %v335, %v341
        %v344 = vlaneseq
        %vm345 = vcmp.ge.s32.totalorder %v344, 0
        %vm346 = vcmp.lt.s32.totalorder %v344, 256
        %vm347 = vmand %vm345, %vm346
        %348 = vst.msk [vmem:[%s229] ss:$4 sm:$0x3] %vm347, %v342
        %s349 = sld [smem:[#allocation7 + $0x80]]
        %v350 = vstv %s349
        %v351 = vmul.f32 %v232, %v350
        %v352 = vmul.f32 %v233, %v350
        %s353 = sld [smem:[#allocation7 + $0x81]]
        %v354 = vstv %s353
        %v355 = vmul.f32 %v232, %v354
        %v356 = vmul.f32 %v233, %v354
        %v359 = vrot.slane %v355, 1
        %v360 = vrot.slane %v356, 1
        %v363 = vadd.f32 %v351, %v359
        %v364 = vadd.f32 %v352, %v360
        %s365 = sld [smem:[#allocation7 + $0x82]]
        %v366 = vstv %s365
        %v367 = vmul.f32 %v232, %v366
        %v368 = vmul.f32 %v233, %v366
        %v371 = vrot.slane %v367, 2
        %v372 = vrot.slane %v368, 2
        %v375 = vadd.f32 %v363, %v371
        %v376 = vadd.f32 %v364, %v372
        %s377 = sld [smem:[#allocation7 + $0x83]]
        %v378 = vstv %s377
        %v379 = vmul.f32 %v232, %v378
        %v380 = vmul.f32 %v233, %v378
        %v383 = vrot.slane %v379, 3
        %v384 = vrot.slane %v380, 3
        %v387 = vadd.f32 %v375, %v383
        %v388 = vadd.f32 %v376, %v384
        %s389 = sld [smem:[#allocation7 + $0x84]]
        %v390 = vstv %s389
        %v391 = vmul.f32 %v232, %v390
        %v392 = vmul.f32 %v233, %v390
        %v395 = vrot.slane %v391, 4
        %v396 = vrot.slane %v392, 4
        %v399 = vadd.f32 %v387, %v395
        %v400 = vadd.f32 %v388, %v396
        %s401 = sld [smem:[#allocation7 + $0x85]]
        %v402 = vstv %s401
        %v403 = vmul.f32 %v232, %v402
        %v404 = vmul.f32 %v233, %v402
        %v407 = vrot.slane %v403, 5
        %v408 = vrot.slane %v404, 5
        %v411 = vadd.f32 %v399, %v407
        %v412 = vadd.f32 %v400, %v408
        %s413 = sld [smem:[#allocation7 + $0x86]]
        %v414 = vstv %s413
        %v415 = vmul.f32 %v232, %v414
        %v416 = vmul.f32 %v233, %v414
        %v419 = vrot.slane %v415, 6
        %v420 = vrot.slane %v416, 6
        %v423 = vadd.f32 %v411, %v419
        %v424 = vadd.f32 %v412, %v420
        %s425 = sld [smem:[#allocation7 + $0x87]]
        %v426 = vstv %s425
        %v427 = vmul.f32 %v232, %v426
        %v428 = vmul.f32 %v233, %v426
        %v431 = vrot.slane %v427, 7
        %v432 = vrot.slane %v428, 7
        %v435 = vadd.f32 %v423, %v431
        %v436 = vadd.f32 %v424, %v432
        %s437 = sld [smem:[#allocation8 + $0x1]]
        %v438 = vstv %s437
        %v439 = vadd.f32 %v435, %v438
        %v440 = vadd.f32 %v436, %v438
        %v443 = vcombine.low %v439, %v440
        %v445 = vunpack.c.l.s4 1966171168
        %v446 = vunpack.c.0.s8 %v445
        %v447 = vlaneseq
        %v448 = vshrl.u32 %v447, 7
        %v449 = vsub.s32 %v446, %v448
        %v450 = vrot.slane %v443, %v449
        %v452 = vunpack.c.l.s4 1966171168
        %v453 = vunpack.c.0.s8 %v452
        %v454 = vlaneseq
        %v455 = vshrl.u32 %v454, 7
        %v456 = vsub.s32 %v453, %v455
        %v457 = vrot.slane %v450, %v456
        %s459 = scalar_lea.vmem %s229, 1 [#allocation9]
        %460 = vst.msk [vmem:[%s459] ss:$4 sm:$0x3] %vm347, %v457
        %s461 = sld [smem:[#allocation7 + $0x100]]
        %v462 = vstv %s461
        %v463 = vmul.f32 %v232, %v462
        %v464 = vmul.f32 %v233, %v462
        %s465 = sld [smem:[#allocation7 + $0x101]]
        %v466 = vstv %s465
        %v467 = vmul.f32 %v232, %v466
        %v468 = vmul.f32 %v233, %v466
        %v471 = vrot.slane %v467, 1
        %v472 = vrot.slane %v468, 1
        %v475 = vadd.f32 %v463, %v471
        %v476 = vadd.f32 %v464, %v472
        %s477 = sld [smem:[#allocation7 + $0x102]]
        %v478 = vstv %s477
        %v479 = vmul.f32 %v232, %v478
        %v480 = vmul.f32 %v233, %v478
        %v483 = vrot.slane %v479, 2
        %v484 = vrot.slane %v480, 2
        %v487 = vadd.f32 %v475, %v483
        %v488 = vadd.f32 %v476, %v484
        %s489 = sld [smem:[#allocation7 + $0x103]]
        %v490 = vstv %s489
        %v491 = vmul.f32 %v232, %v490
        %v492 = vmul.f32 %v233, %v490
        %v495 = vrot.slane %v491, 3
        %v496 = vrot.slane %v492, 3
        %v499 = vadd.f32 %v487, %v495
        %v500 = vadd.f32 %v488, %v496
        %s501 = sld [smem:[#allocation7 + $0x104]]
        %v502 = vstv %s501
        %v503 = vmul.f32 %v232, %v502
        %v504 = vmul.f32 %v233, %v502
        %v507 = vrot.slane %v503, 4
        %v508 = vrot.slane %v504, 4
        %v511 = vadd.f32 %v499, %v507
        %v512 = vadd.f32 %v500, %v508
        %s513 = sld [smem:[#allocation7 + $0x105]]
        %v514 = vstv %s513
        %v515 = vmul.f32 %v232, %v514
        %v516 = vmul.f32 %v233, %v514
        %v519 = vrot.slane %v515, 5
        %v520 = vrot.slane %v516, 5
        %v523 = vadd.f32 %v511, %v519
        %v524 = vadd.f32 %v512, %v520
        %s525 = sld [smem:[#allocation7 + $0x106]]
        %v526 = vstv %s525
        %v527 = vmul.f32 %v232, %v526
        %v528 = vmul.f32 %v233, %v526
        %v531 = vrot.slane %v527, 6
        %v532 = vrot.slane %v528, 6
        %v535 = vadd.f32 %v523, %v531
        %v536 = vadd.f32 %v524, %v532
        %s537 = sld [smem:[#allocation7 + $0x107]]
        %v538 = vstv %s537
        %v539 = vmul.f32 %v232, %v538
        %v540 = vmul.f32 %v233, %v538
        %v543 = vrot.slane %v539, 7
        %v544 = vrot.slane %v540, 7
        %v547 = vadd.f32 %v535, %v543
        %v548 = vadd.f32 %v536, %v544
        %s549 = sld [smem:[#allocation8 + $0x2]]
        %v550 = vstv %s549
        %v551 = vadd.f32 %v547, %v550
        %v552 = vadd.f32 %v548, %v550
        %v555 = vcombine.low %v551, %v552
        %v557 = vunpack.c.l.s4 1966171168
        %v558 = vunpack.c.0.s8 %v557
        %v559 = vlaneseq
        %v560 = vshrl.u32 %v559, 7
        %v561 = vsub.s32 %v558, %v560
        %v562 = vrot.slane %v555, %v561
        %v564 = vunpack.c.l.s4 1966171168
        %v565 = vunpack.c.0.s8 %v564
        %v566 = vlaneseq
        %v567 = vshrl.u32 %v566, 7
        %v568 = vsub.s32 %v565, %v567
        %v569 = vrot.slane %v562, %v568
        %s571 = scalar_lea.vmem %s229, 2 [#allocation9]
        %572 = vst.msk [vmem:[%s571] ss:$4 sm:$0x3] %vm347, %v569
        %s573 = sld [smem:[#allocation7 + $0x180]]
        %v574 = vstv %s573
        %v575 = vmul.f32 %v232, %v574
        %v576 = vmul.f32 %v233, %v574
        %s577 = sld [smem:[#allocation7 + $0x181]]
        %v578 = vstv %s577
        %v579 = vmul.f32 %v232, %v578
        %v580 = vmul.f32 %v233, %v578
        %v583 = vrot.slane %v579, 1
        %v584 = vrot.slane %v580, 1
        %v587 = vadd.f32 %v575, %v583
        %v588 = vadd.f32 %v576, %v584
        %s589 = sld [smem:[#allocation7 + $0x182]]
        %v590 = vstv %s589
        %v591 = vmul.f32 %v232, %v590
        %v592 = vmul.f32 %v233, %v590
        %v595 = vrot.slane %v591, 2
        %v596 = vrot.slane %v592, 2
        %v599 = vadd.f32 %v587, %v595
        %v600 = vadd.f32 %v588, %v596
        %s601 = sld [smem:[#allocation7 + $0x183]]
        %v602 = vstv %s601
        %v603 = vmul.f32 %v232, %v602
        %v604 = vmul.f32 %v233, %v602
        %v607 = vrot.slane %v603, 3
        %v608 = vrot.slane %v604, 3
        %v611 = vadd.f32 %v599, %v607
        %v612 = vadd.f32 %v600, %v608
        %s613 = sld [smem:[#allocation7 + $0x184]]
        %v614 = vstv %s613
        %v615 = vmul.f32 %v232, %v614
        %v616 = vmul.f32 %v233, %v614
        %v619 = vrot.slane %v615, 4
        %v620 = vrot.slane %v616, 4
        %v623 = vadd.f32 %v611, %v619
        %v624 = vadd.f32 %v612, %v620
        %s625 = sld [smem:[#allocation7 + $0x185]]
        %v626 = vstv %s625
        %v627 = vmul.f32 %v232, %v626
        %v628 = vmul.f32 %v233, %v626
        %v631 = vrot.slane %v627, 5
        %v632 = vrot.slane %v628, 5
        %v635 = vadd.f32 %v623, %v631
        %v636 = vadd.f32 %v624, %v632
        %s637 = sld [smem:[#allocation7 + $0x186]]
        %v638 = vstv %s637
        %v639 = vmul.f32 %v232, %v638
        %v640 = vmul.f32 %v233, %v638
        %v643 = vrot.slane %v639, 6
        %v644 = vrot.slane %v640, 6
        %v647 = vadd.f32 %v635, %v643
        %v648 = vadd.f32 %v636, %v644
        %s649 = sld [smem:[#allocation7 + $0x187]]
        %v650 = vstv %s649
        %v651 = vmul.f32 %v232, %v650
        %v652 = vmul.f32 %v233, %v650
        %v655 = vrot.slane %v651, 7
        %v656 = vrot.slane %v652, 7
        %v659 = vadd.f32 %v647, %v655
        %v660 = vadd.f32 %v648, %v656
        %s661 = sld [smem:[#allocation8 + $0x3]]
        %v662 = vstv %s661
        %v663 = vadd.f32 %v659, %v662
        %v664 = vadd.f32 %v660, %v662
        %v667 = vcombine.low %v663, %v664
        %v669 = vunpack.c.l.s4 1966171168
        %v670 = vunpack.c.0.s8 %v669
        %v671 = vlaneseq
        %v672 = vshrl.u32 %v671, 7
        %v673 = vsub.s32 %v670, %v672
        %v674 = vrot.slane %v667, %v673
        %v676 = vunpack.c.l.s4 1966171168
        %v677 = vunpack.c.0.s8 %v676
        %v678 = vlaneseq
        %v679 = vshrl.u32 %v678, 7
        %v680 = vsub.s32 %v677, %v679
        %v681 = vrot.slane %v674, %v680
        %s683 = scalar_lea.vmem %s229, 3 [#allocation9]
        %684 = vst.msk [vmem:[%s683] ss:$4 sm:$0x3] %vm347, %v681
        %s685 = sand.u32 %s114, 1
        %s686 = scalar_lea.sflag [#allocation4], %s685
        %s687 = sand.u32 %s114, 1
        %s688 = smul.addr %s687, 8
        %s689 = scalar_lea.vmem [#allocation9], %s688
        // Predicated region
        $region45: #{tpu_custom_call.1} parent=31 // pred_check
          %p690 = pneg %p124
        $region46: #{tpu_custom_call.1} parent=31 // pred_check_branch
          %692 = sbr.rel (%p690) target = $region48
        $region47: #{tpu_custom_call.1} parent=31 // pred_region
          %s693 = smul.u32 2, %s27
          %s695 = ssub.s32 128, 128
          %696 = vsyncadd %s686, %s695
          %s697 = smul.addr %s26, 2
          %s698 = sadd.s32 %s693, %s697
          %s699 = smul.addr %s698, 64
          %s700 = scalar_lea.hbm %s3, %s699
          %s702 = sshll.u32 %s689, 4
          %s703 = int_to_ptr.vmem [resolvable:$true] %s702
          %705 = dma.vmem_to_hbm [thread:$0]  %s703, 128, %s700, %s686
        $region48: #{tpu_custom_call.1} parent=31 // pred_fallthru
          _
      $region32: #{tpu_custom_call.1} parent=5 // pred_fallthru
        _
      %p706 = scmp.le.s32.totalorder 2, %s17
      // Predicated region
      $region49: #{tpu_custom_call.1} parent=5 // pred_check
        %p707 = pneg %p706
      $region50: #{tpu_custom_call.1} parent=5 // pred_check_branch
        %709 = sbr.rel (%p707) target = $region52
      $region51: #{tpu_custom_call.1} parent=5 // pred_region
        %s710 = ssub.s32 %s17, 2
        // Predicated region
        $region53: #{tpu_custom_call.1} parent=51 // pred_check
          %p711 = pneg %p130
        $region54: #{tpu_custom_call.1} parent=51 // pred_check_branch
          %713 = sbr.rel (%p711) target = $region56
        $region55: #{tpu_custom_call.1} parent=51 // pred_region
          %s714 = sand.u32 %s115, 1
          %s715 = scalar_lea.sflag [#allocation4], %s714
          %s716 = sand.u32 %s115, 1
          %s717 = smul.addr %s716, 8
          %s718 = scalar_lea.vmem [#allocation9], %s717
          %719 = dma.done %s715, 128
        $region56: #{tpu_custom_call.1} parent=51 // pred_fallthru
          _
      $region52: #{tpu_custom_call.1} parent=5 // pred_fallthru
        _
    $region6: #{tpu_custom_call.1} parent=1 // loop_footer
      %s21 = sadd.s32 1, %s17
    $region7: #{tpu_custom_call.1} parent=1 // loop_footer_branch
      %16 = sbr.rel target = $region3
    $region8: #{tpu_custom_call.1} parent=1 // loop_exit
      _
    %720 = vsyncpa [#allocation3], 1
    %s721 = scalar_lea.sflag [#allocation3], 1
    %722 = vsyncpa %s721, 1
    %723 = vsyncpa [#allocation4], 1
    %s724 = scalar_lea.sflag [#allocation4], 1
    %725 = vsyncpa %s724, 1
    %726 = vsyncpa [#allocation5], 1
    %s727 = scalar_lea.sflag [#allocation5], 1
    %728 = vsyncpa %s727, 1
    %729 = vsyncpa [#allocation6], 1
    %s730 = scalar_lea.sflag [#allocation6], 1
    %731 = vsyncpa %s730, 1

</llo_original>
